<compile_context>
chip_gen: v7x
topology: tpu7x:2x2x1
jax: 0.10.0
libtpu: 0.0.40
codegen_flags: <defaults>
</compile_context>

<pallas_src>
import functools
from typing import Literal

import jax
import jax.numpy as jnp
from jax.experimental import pallas as pl
from jax.experimental.pallas import tpu as pltpu


_LANE = 128        # lane width (last dim of a vreg)
_SUBLANE = 8       # sublane width (second-to-last dim)
_HEAD_ROWS = 8     # sublane-padded 1-wide output head (row 0 is the real output)


def _round_up(x: int, m: int) -> int:
    return ((x + m - 1) // m) * m


def _apply_activation(y, act):
    if act == "relu":
        return jnp.maximum(y, 0.0)
    if act == "tanh":
        return jnp.tanh(y)
    if act == "sigmoid":
        return jax.nn.sigmoid(y)
    if act == "none":
        return y
    raise ValueError(f"Unknown activation function: {act}")


# ---------------------------------------------------------------------------
# Fused MLP kernel: all layers in one body, parameters resident in VMEM.
# ---------------------------------------------------------------------------
def _mlp_fused_kernel(x_ref, *refs, activations):
    """Whole MLP for one batch tile.  refs = (w0, b0, ..., wL, bL, o_ref).

    Hidden layers:  h <- act(h @ W_l + b_l)        in [TB, F] layout (f32 acts)
    Head layer:     o <- act(W_head . h^T + b)     in [HEAD_ROWS, TB] layout
                    (batch-in-lanes -> lane-dense stores, 16x less writeback;
                     only row 0 is the real 1-wide output)
    """
    o_ref = refs[-1]
    wb_refs = refs[:-1]
    n_layers = len(activations)
    assert len(wb_refs) == 2 * n_layers

    h = x_ref[...]                                   # [TB, F0]  (f32 or bf16)
    for l in range(n_layers - 1):
        w_ref = wb_refs[2 * l]                       # [Fin(_pad), Fout_pad]
        b_ref = wb_refs[2 * l + 1]                   # [1, Fout_pad] (f32)
        y = jnp.dot(h.astype(w_ref.dtype), w_ref[...],
                    preferred_element_type=jnp.float32)   # MXU, f32 accumulate
        y = y + b_ref[...].astype(jnp.float32)
        h = _apply_activation(y, activations[l])     # activations stay f32

    # Output head: weight stored transposed [_HEAD_ROWS, Fin(_pad)], f32,
    # only row 0 real.  Contract the feature dims (q@k^T pattern) to get the
    # batch-in-lanes result directly — no explicit transpose needed.
    w_ref = wb_refs[2 * (n_layers - 1)]              # [_HEAD_ROWS, Fin] (f32)
    b_ref = wb_refs[2 * (n_layers - 1) + 1]          # [_HEAD_ROWS, 1]   (f32)
    y = jax.lax.dot_general(
        w_ref[...], h.astype(jnp.float32),
        dimension_numbers=(((1,), (1,)), ((), ())),
        preferred_element_type=jnp.float32)          # [_HEAD_ROWS, TB]
    y = y + b_ref[...].astype(jnp.float32)           # lane-broadcast bias
    y = _apply_activation(y, activations[-1])
    o_ref[...] = y.astype(o_ref.dtype)


def _fused_mlp_call(x, padded_params, activations, batch_tile, vmem_limit_bytes):
    b_pad, in_feat = x.shape
    n_blocks = b_pad // batch_tile

    # x: batch-tiled, full (unpadded) feature dim -> one contiguous DMA/tile.
    in_specs = [pl.BlockSpec((batch_tile, in_feat), lambda i: (i, 0))]
    flat_args = [x]
    for w, b in padded_params:
        # Constant index_map -> parameters stay resident in VMEM across steps.
        in_specs.append(pl.BlockSpec(w.shape, lambda i: (0, 0)))
        in_specs.append(pl.BlockSpec(b.shape, lambda i: (0, 0)))
        flat_args.extend([w, b])

    kernel = functools.partial(_mlp_fused_kernel, activations=tuple(activations))

    return pl.pallas_call(
        kernel,
        out_shape=jax.ShapeDtypeStruct((_HEAD_ROWS, b_pad), jnp.float32),
        grid_spec=pl.GridSpec(
            grid=(n_blocks,),
            in_specs=in_specs,
            out_specs=pl.BlockSpec((_HEAD_ROWS, batch_tile), lambda i: (0, i)),
        ),
        compiler_params=pltpu.CompilerParams(
            dimension_semantics=("parallel",),   # batch axis: v7x megacore split
            vmem_limit_bytes=vmem_limit_bytes,
        ),
    )(*flat_args)


def _choose_batch_tiling(batch: int, max_batch_tile: int) -> tuple[int, int]:
    """Pick (rows per grid step, padded batch).

    Small batches run as a single full block.  Larger batches use lane-multiple
    tiles (so the transposed (HEAD_ROWS, tile) output block stays legal and
    lane-dense), capped near batch/2 so the parallel grid has >= 2 blocks and
    both v7x TensorCores get work.
    """
    b8 = _round_up(batch, _SUBLANE)
    if b8 <= 2 * _LANE:
        return b8, b8                         # one block == full array dims
    max_tile = max(_LANE, (max_batch_tile // _LANE) * _LANE)
    half = max(_LANE, (b8 // (2 * _LANE)) * _LANE)   # ~batch/2, lane multiple
    tb = min(max_tile, half)
    return tb, _round_up(b8, tb)


# ---------------------------------------------------------------------------
# MLP wrapper (mirrors the PyTorch MultiLayerPerceptron forward)
# ---------------------------------------------------------------------------
class MultiLayerPerceptronPallas:
    def __init__(
        self,
        input_size: int,
        hidden_sizes: list[int],
        activations: list[Literal["relu", "tanh", "sigmoid"]],
        output_activation: Literal["sigmoid", "none"] = "sigmoid",
        *,
        key: jax.Array,
        param_dtype=jnp.float32,     # jnp.bfloat16 on v6e/v7x: bf16 MXU + half DMA
        max_batch_tile: int = 2048,  # rows per grid step (lane-multiple when tiled)
    ):
        assert len(hidden_sizes) == len(activations)
        if output_activation not in ("sigmoid", "none"):
            raise ValueError(f"Unknown output activation function: {output_activation}")
        for a in activations:
            if a not in ("relu", "tanh", "sigmoid"):
                raise ValueError(f"Unknown activation function: {a}")

        self.input_size = input_size
        self.hidden_sizes = list(hidden_sizes)
        self.activations = list(activations) + [output_activation]
        self.param_dtype = jnp.dtype(param_dtype)
        # Stream x in the same dtype as the weights (halves x DMA for bf16).
        self.x_dtype = (jnp.bfloat16 if self.param_dtype == jnp.dtype(jnp.bfloat16)
                        else jnp.float32)
        self.max_batch_tile = max(int(max_batch_tile), _SUBLANE)

        sizes = [input_size] + self.hidden_sizes + [1]
        n_layers = len(sizes) - 1
        self.params = []          # unpadded f32 (pure-JAX reference)
        self.padded_params = []   # lane-padded, kernel-ready

        for l, (in_size, out_size) in enumerate(zip(sizes[:-1], sizes[1:])):
            key, kw, kb = jax.random.split(key, 3)
            # torch.nn.Linear-style U(-1/sqrt(in), 1/sqrt(in)) init
            bound = 1.0 / (in_size ** 0.5)
            w = jax.random.uniform(kw, (in_size, out_size), jnp.float32, -bound, bound)
            b = jax.random.uniform(kb, (out_size,), jnp.float32, -bound, bound)
            self.params.append((w, b))

            # Input-feature dim: unpadded for the first layer (x stays unpadded
            # in HBM); otherwise matches the previous layer's lane-padded width.
            # Zero-padded weight rows keep padded-lane garbage (e.g. sigmoid(0))
            # numerically inert downstream.
            ip = in_size if l == 0 else _round_up(in_size, _LANE)
            if l == n_layers - 1:
                # Transposed head: [HEAD_ROWS, Fin], only row 0 real; kept f32
                # (tiny + VMEM-resident, avoids bf16 precision on the head).
                wp = (jnp.zeros((_HEAD_ROWS, ip), jnp.float32)
                      .at[0, :in_size].set(w[:, 0]))
                bp = jnp.zeros((_HEAD_ROWS, 1), jnp.float32).at[0, 0].set(b[0])
                self.padded_params.append((wp, bp))
            else:
                op = _round_up(out_size, _LANE)
                wp = (jnp.zeros((ip, op), jnp.float32)
                      .at[:in_size, :out_size].set(w))
                bp = jnp.zeros((1, op), jnp.float32).at[0, :out_size].set(b)
                self.padded_params.append((wp.astype(self.param_dtype), bp))

    # -- VMEM budget ----------------------------------------------------------
    def _vmem_limit(self, batch_tile: int) -> int:
        resident = sum(w.size * w.dtype.itemsize + b.size * b.dtype.itemsize
                       for w, b in self.padded_params)
        x_tile = batch_tile * self.input_size * jnp.dtype(self.x_dtype).itemsize
        out_tile = _HEAD_ROWS * batch_tile * 4
        widths = [self.input_size] + [_round_up(h, _LANE) for h in self.hidden_sizes]
        inter = 3 * batch_tile * max(widths + [_LANE]) * 4
        # Double-buffered params + double-buffered x/out tiles + live f32
        # intermediates, 2x headroom; capped well under v7x's 64 MiB VMEM.
        footprint = 2 * resident + 2 * (x_tile + out_tile) + inter
        return int(min(48 * 2**20, max(16 * 2**20, 2 * footprint)))

    # -- Pallas forward --------------------------------------------------------
    def forward(self, x: jax.Array) -> jax.Array:
        """x: [batch, input_size] -> [batch, 1] (float32)."""
        batch, feat = x.shape
        assert feat == self.input_size
        xp = x.astype(self.x_dtype)                  # no feature padding in HBM
        tb, b_pad = _choose_batch_tiling(batch, self.max_batch_tile)
        if b_pad != batch:
            xp = jnp.pad(xp, ((0, b_pad - batch), (0, 0)))

        out = _fused_mlp_call(xp, self.padded_params, self.activations, tb,
                              self._vmem_limit(tb))  # [HEAD_ROWS, b_pad] f32
        return out[0, :batch][:, None]               # [batch, 1]

    def predict(self, x: jax.Array) -> jax.Array:
        return jnp.round(self.forward(x))

    # -- Pure-JAX reference (unpadded f32 params) ------------------------------
    def reference(self, x: jax.Array) -> jax.Array:
        h = x.astype(jnp.float32)
        for (w, b), act in zip(self.params, self.activations):
            h = _apply_activation(h @ w + b[None, :], act)
        return h

    # TODO(synk): save/load (torch state_dict file I/O) intentionally omitted —
    # host-side serialization, no kernel equivalent.


if __name__ == "__main__":
    key = jax.random.PRNGKey(0)
    k_model, k_x1, k_x2 = jax.random.split(key, 3)

    input_size = 16
    hidden_sizes = [32, 16]
    activations = ["relu", "tanh"]

    # --- f32 model, small batch (single tile): strict correctness -----------
    mlp = MultiLayerPerceptronPallas(
        input_size, hidden_sizes, activations, output_activation="sigmoid",
        key=k_model, param_dtype=jnp.float32)
    x = jax.random.normal(k_x1, (8, input_size), jnp.float32)
    out = jax.block_until_ready(mlp.forward(x))
    ref = mlp.reference(x)
    assert out.shape == (8, 1), out.shape
    assert jnp.allclose(out, ref, atol=1e-5, rtol=1e-5), (out, ref)
    pred = jax.block_until_ready(mlp.predict(x))
    assert pred.shape == (8, 1), pred.shape

    # --- f32 model, uneven batch + multi-step grid + 'none' head ------------
    # (exercises batch padding, lane-multiple tiles, resident weights, and the
    #  pass-through output activation)
    mlp_none = MultiLayerPerceptronPallas(
        input_size, hidden_sizes, activations, output_activation="none",
        key=k_model, param_dtype=jnp.float32, max_batch_tile=128)
    x2 = jax.random.normal(k_x2, (300, input_size), jnp.float32)
    out2 = jax.block_until_ready(mlp_none.forward(x2))
    ref2 = mlp_none.reference(x2)
    assert out2.shape == (300, 1), out2.shape
    assert jnp.allclose(out2, ref2, atol=1e-4, rtol=1e-4), (out2, ref2)

    # --- bf16 weights + bf16 x streaming (v6e/v7x fast path) ----------------
    mlp_bf16 = MultiLayerPerceptronPallas(
        input_size, hidden_sizes, activations, output_activation="sigmoid",
        key=k_model, param_dtype=jnp.bfloat16)
    out3 = jax.block_until_ready(mlp_bf16.forward(x))
    ref3 = mlp_bf16.reference(x)     # f32 reference of the same params
    assert out3.shape == (8, 1), out3.shape
    assert jnp.allclose(out3, ref3, atol=3e-2, rtol=3e-2), (out3, ref3)

    print("KERNEL_OK")
</pallas_src>

<mosaic_0001>
module attributes {stable_mosaic.version = 11 : i64} {
  func.func @_mlp_fused_kernel(%arg0: i32, %arg1: memref<8x16xf32, #tpu.memory_space<vmem>>, %arg2: memref<16x128xf32, #tpu.memory_space<vmem>>, %arg3: memref<1x128xf32, #tpu.memory_space<vmem>>, %arg4: memref<128x128xf32, #tpu.memory_space<vmem>>, %arg5: memref<1x128xf32, #tpu.memory_space<vmem>>, %arg6: memref<8x128xf32, #tpu.memory_space<vmem>>, %arg7: memref<8x1xf32, #tpu.memory_space<vmem>>, %arg8: memref<8x8xf32, #tpu.memory_space<vmem>>) attributes {dimension_semantics = [#tpu.dimension_semantics<parallel>], iteration_bounds = array<i64: 1>, scalar_prefetch = 0 : i64, scratch_operands = 0 : i64, tpu.core_type = #tpu.core_type<tc>, window_params = [{transform_indices = @transform_0, window_bounds = array<i64: 8, 16>}, {pipeline_mode = #tpu.pipeline_mode<synchronous>, transform_indices = @transform_1, window_bounds = array<i64: 16, 128>}, {pipeline_mode = #tpu.pipeline_mode<synchronous>, transform_indices = @transform_2, window_bounds = array<i64: 1, 128>}, {pipeline_mode = #tpu.pipeline_mode<synchronous>, transform_indices = @transform_3, window_bounds = array<i64: 128, 128>}, {pipeline_mode = #tpu.pipeline_mode<synchronous>, transform_indices = @transform_4, window_bounds = array<i64: 1, 128>}, {pipeline_mode = #tpu.pipeline_mode<synchronous>, transform_indices = @transform_5, window_bounds = array<i64: 8, 128>}, {pipeline_mode = #tpu.pipeline_mode<synchronous>, transform_indices = @transform_6, window_bounds = array<i64: 8, 1>}, {transform_indices = @transform_7, window_bounds = array<i64: 8, 8>}]} {
    %c0 = arith.constant 0 : index
    %c0_0 = arith.constant 0 : index
    %0 = vector.load %arg1[%c0, %c0_0] : memref<8x16xf32, #tpu.memory_space<vmem>>, vector<8x16xf32>
    %c0_1 = arith.constant 0 : index
    %c0_2 = arith.constant 0 : index
    %1 = vector.load %arg2[%c0_1, %c0_2] : memref<16x128xf32, #tpu.memory_space<vmem>>, vector<16x128xf32>
    %cst = arith.constant dense<0.000000e+00> : vector<8x128xf32>
    %2 = tpu.matmul %0, %1, %cst {dimension_numbers = #tpu.dot_dimension_numbers<[1], [0], [0], [1], [0, 0, 1, 1], [], []>} : vector<8x16xf32>, vector<16x128xf32>, vector<8x128xf32> -> vector<8x128xf32>
    %c0_3 = arith.constant 0 : index
    %c0_4 = arith.constant 0 : index
    %3 = vector.load %arg3[%c0_3, %c0_4] : memref<1x128xf32, #tpu.memory_space<vmem>>, vector<1x128xf32>
    %4 = vector.broadcast %3 : vector<1x128xf32> to vector<8x128xf32>
    %5 = arith.addf %2, %4 : vector<8x128xf32>
    %cst_5 = arith.constant 0.000000e+00 : f32
    %6 = vector.broadcast %cst_5 : f32 to vector<8x128xf32>
    %7 = arith.maximumf %5, %6 : vector<8x128xf32>
    %c0_6 = arith.constant 0 : index
    %c0_7 = arith.constant 0 : index
    %8 = vector.load %arg4[%c0_6, %c0_7] : memref<128x128xf32, #tpu.memory_space<vmem>>, vector<128x128xf32>
    %cst_8 = arith.constant dense<0.000000e+00> : vector<8x128xf32>
    %9 = tpu.matmul %7, %8, %cst_8 {dimension_numbers = #tpu.dot_dimension_numbers<[1], [0], [0], [1], [0, 0, 1, 1], [], []>} : vector<8x128xf32>, vector<128x128xf32>, vector<8x128xf32> -> vector<8x128xf32>
    %c0_9 = arith.constant 0 : index
    %c0_10 = arith.constant 0 : index
    %10 = vector.load %arg5[%c0_9, %c0_10] : memref<1x128xf32, #tpu.memory_space<vmem>>, vector<1x128xf32>
    %11 = vector.broadcast %10 : vector<1x128xf32> to vector<8x128xf32>
    %12 = arith.addf %9, %11 : vector<8x128xf32>
    %13 = math.tanh %12 : vector<8x128xf32>
    %c0_11 = arith.constant 0 : index
    %c0_12 = arith.constant 0 : index
    %14 = vector.load %arg6[%c0_11, %c0_12] : memref<8x128xf32, #tpu.memory_space<vmem>>, vector<8x128xf32>
    %cst_13 = arith.constant dense<0.000000e+00> : vector<8x8xf32>
    %15 = tpu.matmul %14, %13, %cst_13 {dimension_numbers = #tpu.dot_dimension_numbers<[1], [1], [0], [0], [0, 0, 1, 0], [], []>} : vector<8x128xf32>, vector<8x128xf32>, vector<8x8xf32> -> vector<8x8xf32>
    %c0_14 = arith.constant 0 : index
    %c0_15 = arith.constant 0 : index
    %16 = vector.load %arg7[%c0_14, %c0_15] : memref<8x1xf32, #tpu.memory_space<vmem>>, vector<8x1xf32>
    %17 = vector.broadcast %16 : vector<8x1xf32> to vector<8x8xf32>
    %18 = arith.addf %15, %17 : vector<8x8xf32>
    %19 = arith.negf %18 : vector<8x8xf32>
    %20 = math.exp %19 : vector<8x8xf32>
    %cst_16 = arith.constant 1.000000e+00 : f32
    %21 = vector.broadcast %cst_16 : f32 to vector<8x8xf32>
    %22 = arith.addf %21, %20 : vector<8x8xf32>
    %23 = arith.divf %21, %22 : vector<8x8xf32>
    %c0_17 = arith.constant 0 : index
    %c0_18 = arith.constant 0 : index
    %24 = vector.load %arg8[%c0_17, %c0_18] : memref<8x8xf32, #tpu.memory_space<vmem>>, vector<8x8xf32>
    tpu.vector_store %arg8[%c0_17, %c0_18], %23 {strides = array<i32>} : memref<8x8xf32, #tpu.memory_space<vmem>>, vector<8x8xf32>,
    return
  }
  func.func @transform_0(%arg0: i32) -> (i32, i32) {
    %c0_i32 = arith.constant 0 : i32
    %c0_i32_0 = arith.constant 0 : i32
    return %arg0, %c0_i32 : i32, i32
  }
  func.func @transform_1(%arg0: i32) -> (i32, i32) {
    %c0_i32 = arith.constant 0 : i32
    %c0_i32_0 = arith.constant 0 : i32
    %c0_i32_1 = arith.constant 0 : i32
    return %c0_i32, %c0_i32_0 : i32, i32
  }
  func.func @transform_2(%arg0: i32) -> (i32, i32) {
    %c0_i32 = arith.constant 0 : i32
    %c0_i32_0 = arith.constant 0 : i32
    %c0_i32_1 = arith.constant 0 : i32
    return %c0_i32, %c0_i32_0 : i32, i32
  }
  func.func @transform_3(%arg0: i32) -> (i32, i32) {
    %c0_i32 = arith.constant 0 : i32
    %c0_i32_0 = arith.constant 0 : i32
    %c0_i32_1 = arith.constant 0 : i32
    return %c0_i32, %c0_i32_0 : i32, i32
  }
  func.func @transform_4(%arg0: i32) -> (i32, i32) {
    %c0_i32 = arith.constant 0 : i32
    %c0_i32_0 = arith.constant 0 : i32
    %c0_i32_1 = arith.constant 0 : i32
    return %c0_i32, %c0_i32_0 : i32, i32
  }
  func.func @transform_5(%arg0: i32) -> (i32, i32) {
    %c0_i32 = arith.constant 0 : i32
    %c0_i32_0 = arith.constant 0 : i32
    %c0_i32_1 = arith.constant 0 : i32
    return %c0_i32, %c0_i32_0 : i32, i32
  }
  func.func @transform_6(%arg0: i32) -> (i32, i32) {
    %c0_i32 = arith.constant 0 : i32
    %c0_i32_0 = arith.constant 0 : i32
    %c0_i32_1 = arith.constant 0 : i32
    return %c0_i32, %c0_i32_0 : i32, i32
  }
  func.func @transform_7(%arg0: i32) -> (i32, i32) {
    %c0_i32 = arith.constant 0 : i32
    %c0_i32_0 = arith.constant 0 : i32
    return %c0_i32, %arg0 : i32, i32
  }
}

</mosaic_0001>

<llo_original>
// kernel: tpu_custom_call.1
$region0: #{tpu_custom_call.1}
  #allocation0 [shape = 'u32[]', space=smem, size = 0x4, offset = 0x4, fixed_abs, tag = 'smem constant byte address 0x4 - core index']
  #allocation1 [shape = 'u32[144,128]{1,0:T(1,128)}', space=vmem, size = 0x12000, scoped, tag = 'internal scratch']
  %s0 = inlined_call_operand.vmem [shape: f32[8,16], index: 0, kind: input, shape index: {}]
  %s1 = inlined_call_operand.hbm [shape: f32[16,128], index: 1, kind: input, shape index: {}]
  %s2 = inlined_call_operand.hbm [shape: f32[1,128], index: 2, kind: input, shape index: {}]
  %s3 = inlined_call_operand.hbm [shape: f32[128,128], index: 3, kind: input, shape index: {}]
  %s4 = inlined_call_operand.vmem [shape: f32[1,128], index: 4, kind: input, shape index: {}]
  %s5 = inlined_call_operand.vmem [shape: f32[8,128], index: 5, kind: input, shape index: {}]
  %s6 = inlined_call_operand.vmem [shape: f32[8,1], index: 6, kind: input, shape index: {}]
  %s7 = inlined_call_operand.hbm [shape: f32[8,8], index: 7, kind: output, shape index: {}]
  %s8 = sld [smem:[#allocation0]]
  $region50: #{tpu_custom_call.1} parent=0
    _
  %s10 = ssub.s32 1, %s8
  %s11 = scalar_select 0, %s10, %s8
  $region1: #{tpu_custom_call.1} parent=0
    #allocation2 [shape = 'u8[8192]{0}', space=vmem, size = 0x2000, scoped, tag = 'input window, operand 1, single buffered']
    #allocation3 [shape = 's32[1]{0}', space=sflag, size = 0x4, scoped, tag = 'scoped memory for tpu_custom_call.1']
    #allocation4 [shape = 's32[1]{0}', space=sflag, size = 0x4, scoped, tag = 'scoped memory for tpu_custom_call.1']
    #allocation5 [shape = 'u8[512]{0}', space=vmem, size = 0x400, scoped, tag = 'input window, operand 2, single buffered']
    #allocation6 [shape = 's32[1]{0}', space=sflag, size = 0x4, scoped, tag = 'scoped memory for tpu_custom_call.1']
    #allocation7 [shape = 'u8[65536]{0}', space=vmem, size = 0x10000, scoped, tag = 'input window, operand 3, single buffered']
    #allocation8 [shape = 'u8[4096]{0}', space=vmem, size = 0x1000, scoped, tag = 'output window, operand 0, single buffered']
    %12 = vsyncpa [#allocation3], 0
    %13 = vsyncpa [#allocation6], 0
    %14 = vsyncpa [#allocation4], 0
    // Predicated region
    $region2: #{tpu_custom_call.1} parent=1 // pred_check
      _
    $region3: #{tpu_custom_call.1} parent=1 // pred_check_branch
      %16 = sbr.rel (0) target = $region5
    $region4: #{tpu_custom_call.1} parent=1 // pred_region
      _
    $region5: #{tpu_custom_call.1} parent=1 // pred_fallthru
      _
    // Predicated region
    $region6: #{tpu_custom_call.1} parent=1 // pred_check
      _
    $region7: #{tpu_custom_call.1} parent=1 // pred_check_branch
      %18 = sbr.rel (0) target = $region9
    $region8: #{tpu_custom_call.1} parent=1 // pred_region
      %s20 = ssub.s32 256, 256
      %21 = vsyncadd [#allocation3], %s20
      %s22 = sshll.u32 [#allocation2], 4
      %s23 = int_to_ptr.vmem [resolvable:$true] %s22
      %28 = dma.hbm_to_vmem [thread:$0]  %s1, 256, %s23, [#allocation3], 128, 128, 8
    $region9: #{tpu_custom_call.1} parent=1 // pred_fallthru
      _
    // Predicated region
    $region10: #{tpu_custom_call.1} parent=1 // pred_check
      _
    $region11: #{tpu_custom_call.1} parent=1 // pred_check_branch
      %30 = sbr.rel (0) target = $region13
    $region12: #{tpu_custom_call.1} parent=1 // pred_region
      %s32 = ssub.s32 16, 16
      %33 = vsyncadd [#allocation6], %s32
      %s35 = sshll.u32 [#allocation5], 4
      %s36 = int_to_ptr.vmem [resolvable:$true] %s35
      %38 = dma.hbm_to_vmem [thread:$0]  %s2, 16, %s36, [#allocation6]
    $region13: #{tpu_custom_call.1} parent=1 // pred_fallthru
      _
    // Predicated region
    $region14: #{tpu_custom_call.1} parent=1 // pred_check
      _
    $region15: #{tpu_custom_call.1} parent=1 // pred_check_branch
      %40 = sbr.rel (0) target = $region17
    $region16: #{tpu_custom_call.1} parent=1 // pred_region
      %s42 = ssub.s32 2048, 2048
      %43 = vsyncadd [#allocation6], %s42
      %s44 = sshll.u32 [#allocation7], 4
      %s45 = int_to_ptr.vmem [resolvable:$true] %s44
      %50 = dma.hbm_to_vmem [thread:$0]  %s3, 2048, %s45, [#allocation6], 128, 128, 8
    $region17: #{tpu_custom_call.1} parent=1 // pred_fallthru
      _
    // Predicated region
    $region18: #{tpu_custom_call.1} parent=1 // pred_check
      _
    $region19: #{tpu_custom_call.1} parent=1 // pred_check_branch
      %52 = sbr.rel (0) target = $region21
    $region20: #{tpu_custom_call.1} parent=1 // pred_region
      _
    $region21: #{tpu_custom_call.1} parent=1 // pred_fallthru
      _
    // Predicated region
    $region22: #{tpu_custom_call.1} parent=1 // pred_check
      _
    $region23: #{tpu_custom_call.1} parent=1 // pred_check_branch
      %54 = sbr.rel (0) target = $region25
    $region24: #{tpu_custom_call.1} parent=1 // pred_region
      _
    $region25: #{tpu_custom_call.1} parent=1 // pred_fallthru
      _
    // Predicated region
    $region26: #{tpu_custom_call.1} parent=1 // pred_check
      _
    $region27: #{tpu_custom_call.1} parent=1 // pred_check_branch
      %56 = sbr.rel (0) target = $region29
    $region28: #{tpu_custom_call.1} parent=1 // pred_region
      _
    $region29: #{tpu_custom_call.1} parent=1 // pred_fallthru
      _
    // Predicated region
    $region30: #{tpu_custom_call.1} parent=1 // pred_check
      _
    $region31: #{tpu_custom_call.1} parent=1 // pred_check_branch
      %58 = sbr.rel (0) target = $region33
    $region32: #{tpu_custom_call.1} parent=1 // pred_region
      %59 = dma.done [#allocation3], 256
    $region33: #{tpu_custom_call.1} parent=1 // pred_fallthru
      _
    // Predicated region
    $region34: #{tpu_custom_call.1} parent=1 // pred_check
      _
    $region35: #{tpu_custom_call.1} parent=1 // pred_check_branch
      %61 = sbr.rel (0) target = $region37
    $region36: #{tpu_custom_call.1} parent=1 // pred_region
      %62 = dma.done [#allocation6], 16
    $region37: #{tpu_custom_call.1} parent=1 // pred_fallthru
      _
    // Predicated region
    $region38: #{tpu_custom_call.1} parent=1 // pred_check
      _
    $region39: #{tpu_custom_call.1} parent=1 // pred_check_branch
      %64 = sbr.rel (0) target = $region41
    $region40: #{tpu_custom_call.1} parent=1 // pred_region
      %65 = dma.done [#allocation6], 2048
    $region41: #{tpu_custom_call.1} parent=1 // pred_fallthru
      _
    %v66 = vld [vmem:[%s0] sm:$0xff]
    %v67 = vld [vmem:[#allocation2] sm:$0xff]
    %v68 = vld [vmem:[#allocation2 + $0x8] sm:$0xff]
    %v69 = vld [vmem:[#allocation5] sm:$0x1]
    %v71 = vlaneseq
    %v72 = vshrl.u32 %v71, 7
    %v73 = vsub.s32 0, %v72
    %v74 = vrot.slane %v69, %v73
    %vm76 = vcmask 130048
    %v78 = vsel %vm76, %v66, 0
    %80 = vmatprep.subr.mxu0 0.0
    %81 = vmatpush1.msra.mxu0 %v67
    %82 = vmatprep.subr.mxu0 0.0
    %83 = vmatpush1.msra.mxu0 %v68
    %84 = vmatprep.subr.mxu0 0.0
    %85 = vmatpush1.msra.mxu0 0.0
    %86 = vmatprep.subr.mxu0 0.0
    %87 = vmatpush1.msra.mxu0 0.0
    %88 = vmatprep.subr.mxu0 0.0
    %89 = vmatpush1.msra.mxu0 0.0
    %90 = vmatprep.subr.mxu0 0.0
    %91 = vmatpush1.msra.mxu0 0.0
    %92 = vmatprep.subr.mxu0 0.0
    %93 = vmatpush1.msra.mxu0 0.0
    %94 = vmatprep.subr.mxu0 0.0
    %95 = vmatpush1.msra.mxu0 0.0
    %96 = vmatprep.subr.mxu0 0.0
    %97 = vmatpush1.msra.mxu0 0.0
    %98 = vmatprep.subr.mxu0 0.0
    %99 = vmatpush1.msra.mxu0 0.0
    %100 = vmatprep.subr.mxu0 0.0
    %101 = vmatpush1.msra.mxu0 0.0
    %102 = vmatprep.subr.mxu0 0.0
    %103 = vmatpush1.msra.mxu0 0.0
    %104 = vmatprep.subr.mxu0 0.0
    %105 = vmatpush1.msra.mxu0 0.0
    %106 = vmatprep.subr.mxu0 0.0
    %107 = vmatpush1.msra.mxu0 0.0
    %108 = vmatprep.subr.mxu0 0.0
    %109 = vmatpush1.msra.mxu0 0.0
    %110 = vmatprep.subr.mxu0 0.0
    %111 = vmatpush1.msra.mxu0 0.0
    %112 = vmatprep.subr.mxu0 0.0
    %113 = vmatpush1.msra.mxu0 0.0
    %114 = vmatprep.subr.mxu0 0.0
    %115 = vmatpush1.msra.mxu0 0.0
    %116 = vmatprep.subr.mxu0 0.0
    %117 = vmatpush1.msra.mxu0 0.0
    %118 = vmatprep.subr.mxu0 0.0
    %119 = vmatpush1.msra.mxu0 0.0
    %120 = vmatprep.subr.mxu0 0.0
    %121 = vmatpush1.msra.mxu0 0.0
    %122 = vmatprep.subr.mxu0 0.0
    %123 = vmatpush1.msra.mxu0 0.0
    %124 = vmatprep.subr.mxu0 0.0
    %125 = vmatpush1.msra.mxu0 0.0
    %126 = vmatprep.subr.mxu0 0.0
    %127 = vmatpush1.msra.mxu0 0.0
    %128 = vmatprep.subr.mxu0 0.0
    %129 = vmatpush1.msra.mxu0 0.0
    %130 = vmatprep.subr.mxu0 0.0
    %131 = vmatpush1.msra.mxu0 0.0
    %132 = vmatprep.subr.mxu0 0.0
    %133 = vmatpush1.msra.mxu0 0.0
    %134 = vmatprep.subr.mxu0 0.0
    %135 = vmatpush1.msra.mxu0 0.0
    %136 = vmatprep.subr.mxu0 0.0
    %137 = vmatpush1.msra.mxu0 0.0
    %138 = vmatprep.subr.mxu0 0.0
    %139 = vmatpush1.msra.mxu0 0.0
    %140 = vmatprep.subr.mxu0 0.0
    %141 = vmatpush1.msra.mxu0 0.0
    %142 = vmatprep.subr.mxu0 0.0
    %143 = vmatpush1.msra.mxu0 0.0
    %144 = vmatprep.mubr.f32.mxu0 0.0
    %145 = vmatmul.mubr.f32.gmra.mrb[0].mxu0 %v78
    %v146 = vpop.f32.mrb[0].mxu0
    %v147 = vadd.f32 %v74, %v146
    %v148 = vpop.f32.mrb[0].mxu0
    %149 = vdwg.mxu0
    %v150 = vmax.f32 %v147, 0.0
    %v151 = vld [vmem:[#allocation7] sm:$0xff]
    %v152 = vld [vmem:[#allocation7 + $0x8] sm:$0xff]
    %v153 = vld [vmem:[#allocation7 + $0x10] sm:$0xff]
    %v154 = vld [vmem:[#allocation7 + $0x18] sm:$0xff]
    %v155 = vld [vmem:[#allocation7 + $0x20] sm:$0xff]
    %v156 = vld [vmem:[#allocation7 + $0x28] sm:$0xff]
    %v157 = vld [vmem:[#allocation7 + $0x30] sm:$0xff]
    %v158 = vld [vmem:[#allocation7 + $0x38] sm:$0xff]
    %v159 = vld [vmem:[#allocation7 + $0x40] sm:$0xff]
    %v160 = vld [vmem:[#allocation7 + $0x48] sm:$0xff]
    %v161 = vld [vmem:[#allocation7 + $0x50] sm:$0xff]
    %v162 = vld [vmem:[#allocation7 + $0x58] sm:$0xff]
    %v163 = vld [vmem:[#allocation7 + $0x60] sm:$0xff]
    %v164 = vld [vmem:[#allocation7 + $0x68] sm:$0xff]
    %v165 = vld [vmem:[#allocation7 + $0x70] sm:$0xff]
    %v166 = vld [vmem:[#allocation7 + $0x78] sm:$0xff]
    %v167 = vld [vmem:[%s4] sm:$0x1]
    %v169 = vlaneseq
    %v170 = vshrl.u32 %v169, 7
    %v171 = vsub.s32 0, %v170
    %v172 = vrot.slane %v167, %v171
    %174 = vmatprep.subr.mxu0 0.0
    %175 = vmatpush1.msra.mxu0 %v151
    %176 = vmatprep.subr.mxu0 0.0
    %177 = vmatpush1.msra.mxu0 %v152
    %178 = vmatprep.subr.mxu0 0.0
    %179 = vmatpush1.msra.mxu0 %v153
    %180 = vmatprep.subr.mxu0 0.0
    %181 = vmatpush1.msra.mxu0 %v154
    %182 = vmatprep.subr.mxu0 0.0
    %183 = vmatpush1.msra.mxu0 %v155
    %184 = vmatprep.subr.mxu0 0.0
    %185 = vmatpush1.msra.mxu0 %v156
    %186 = vmatprep.subr.mxu0 0.0
    %187 = vmatpush1.msra.mxu0 %v157
    %188 = vmatprep.subr.mxu0 0.0
    %189 = vmatpush1.msra.mxu0 %v158
    %190 = vmatprep.subr.mxu0 0.0
    %191 = vmatpush1.msra.mxu0 %v159
    %192 = vmatprep.subr.mxu0 0.0
    %193 = vmatpush1.msra.mxu0 %v160
    %194 = vmatprep.subr.mxu0 0.0
    %195 = vmatpush1.msra.mxu0 %v161
    %196 = vmatprep.subr.mxu0 0.0
    %197 = vmatpush1.msra.mxu0 %v162
    %198 = vmatprep.subr.mxu0 0.0
    %199 = vmatpush1.msra.mxu0 %v163
    %200 = vmatprep.subr.mxu0 0.0
    %201 = vmatpush1.msra.mxu0 %v164
    %202 = vmatprep.subr.mxu0 0.0
    %203 = vmatpush1.msra.mxu0 %v165
    %204 = vmatprep.subr.mxu0 0.0
    %205 = vmatpush1.msra.mxu0 %v166
    %206 = vmatprep.subr.mxu0 0.0
    %207 = vmatpush1.msra.mxu0 0.0
    %208 = vmatprep.subr.mxu0 0.0
    %209 = vmatpush1.msra.mxu0 0.0
    %210 = vmatprep.subr.mxu0 0.0
    %211 = vmatpush1.msra.mxu0 0.0
    %212 = vmatprep.subr.mxu0 0.0
    %213 = vmatpush1.msra.mxu0 0.0
    %214 = vmatprep.subr.mxu0 0.0
    %215 = vmatpush1.msra.mxu0 0.0
    %216 = vmatprep.subr.mxu0 0.0
    %217 = vmatpush1.msra.mxu0 0.0
    %218 = vmatprep.subr.mxu0 0.0
    %219 = vmatpush1.msra.mxu0 0.0
    %220 = vmatprep.subr.mxu0 0.0
    %221 = vmatpush1.msra.mxu0 0.0
    %222 = vmatprep.subr.mxu0 0.0
    %223 = vmatpush1.msra.mxu0 0.0
    %224 = vmatprep.subr.mxu0 0.0
    %225 = vmatpush1.msra.mxu0 0.0
    %226 = vmatprep.subr.mxu0 0.0
    %227 = vmatpush1.msra.mxu0 0.0
    %228 = vmatprep.subr.mxu0 0.0
    %229 = vmatpush1.msra.mxu0 0.0
    %230 = vmatprep.subr.mxu0 0.0
    %231 = vmatpush1.msra.mxu0 0.0
    %232 = vmatprep.subr.mxu0 0.0
    %233 = vmatpush1.msra.mxu0 0.0
    %234 = vmatprep.subr.mxu0 0.0
    %235 = vmatpush1.msra.mxu0 0.0
    %236 = vmatprep.subr.mxu0 0.0
    %237 = vmatpush1.msra.mxu0 0.0
    %238 = vmatprep.mubr.f32.mxu0 0.0
    %239 = vmatmul.mubr.f32.gmra.mrb[0].mxu0 %v150
    %v240 = vpop.f32.mrb[0].mxu0
    %v241 = vadd.f32 %v172, %v240
    %v242 = vpop.f32.mrb[0].mxu0
    %243 = vdwg.mxu0
    %v244 = vtanh.pop %v241
    %v245 = vld [vmem:[%s5] sm:$0xff]
    %v246 = vld [vmem:[%s6] sm:$0xff]
    %248 = vset.pattern.permute.xlu0 0
    %249 = vperm.xlu0 %248, %v246
    %v250 = vpop.permute.xlu0 %249
    %252 = vmatprep.subr.mxu0 0.0
    %253 = vmatpush1.xpose.msra.mxu0 %v244
    %254 = vmatprep.subr.mxu0 0.0
    %255 = vmatpush1.xpose.msra.mxu0 0.0
    %256 = vmatprep.subr.mxu0 0.0
    %257 = vmatpush1.xpose.msra.mxu0 0.0
    %258 = vmatprep.subr.mxu0 0.0
    %259 = vmatpush1.xpose.msra.mxu0 0.0
    %260 = vmatprep.subr.mxu0 0.0
    %261 = vmatpush1.xpose.msra.mxu0 0.0
    %262 = vmatprep.subr.mxu0 0.0
    %263 = vmatpush1.xpose.msra.mxu0 0.0
    %264 = vmatprep.subr.mxu0 0.0
    %265 = vmatpush1.xpose.msra.mxu0 0.0
    %266 = vmatprep.subr.mxu0 0.0
    %267 = vmatpush1.xpose.msra.mxu0 0.0
    %268 = vmatprep.subr.mxu0 0.0
    %269 = vmatpush1.xpose.msra.mxu0 0.0
    %270 = vmatprep.subr.mxu0 0.0
    %271 = vmatpush1.xpose.msra.mxu0 0.0
    %272 = vmatprep.subr.mxu0 0.0
    %273 = vmatpush1.xpose.msra.mxu0 0.0
    %274 = vmatprep.subr.mxu0 0.0
    %275 = vmatpush1.xpose.msra.mxu0 0.0
    %276 = vmatprep.subr.mxu0 0.0
    %277 = vmatpush1.xpose.msra.mxu0 0.0
    %278 = vmatprep.subr.mxu0 0.0
    %279 = vmatpush1.xpose.msra.mxu0 0.0
    %280 = vmatprep.subr.mxu0 0.0
    %281 = vmatpush1.xpose.msra.mxu0 0.0
    %282 = vmatprep.subr.mxu0 0.0
    %283 = vmatpush1.xpose.msra.mxu0 0.0
    %284 = vmatprep.subr.mxu0 0.0
    %285 = vmatpush1.xpose.msra.mxu0 0.0
    %286 = vmatprep.subr.mxu0 0.0
    %287 = vmatpush1.xpose.msra.mxu0 0.0
    %288 = vmatprep.subr.mxu0 0.0
    %289 = vmatpush1.xpose.msra.mxu0 0.0
    %290 = vmatprep.subr.mxu0 0.0
    %291 = vmatpush1.xpose.msra.mxu0 0.0
    %292 = vmatprep.subr.mxu0 0.0
    %293 = vmatpush1.xpose.msra.mxu0 0.0
    %294 = vmatprep.subr.mxu0 0.0
    %295 = vmatpush1.xpose.msra.mxu0 0.0
    %296 = vmatprep.subr.mxu0 0.0
    %297 = vmatpush1.xpose.msra.mxu0 0.0
    %298 = vmatprep.subr.mxu0 0.0
    %299 = vmatpush1.xpose.msra.mxu0 0.0
    %300 = vmatprep.subr.mxu0 0.0
    %301 = vmatpush1.xpose.msra.mxu0 0.0
    %302 = vmatprep.subr.mxu0 0.0
    %303 = vmatpush1.xpose.msra.mxu0 0.0
    %304 = vmatprep.subr.mxu0 0.0
    %305 = vmatpush1.xpose.msra.mxu0 0.0
    %306 = vmatprep.subr.mxu0 0.0
    %307 = vmatpush1.xpose.msra.mxu0 0.0
    %308 = vmatprep.subr.mxu0 0.0
    %309 = vmatpush1.xpose.msra.mxu0 0.0
    %310 = vmatprep.subr.mxu0 0.0
    %311 = vmatpush1.xpose.msra.mxu0 0.0
    %312 = vmatprep.subr.mxu0 0.0
    %313 = vmatpush1.xpose.msra.mxu0 0.0
    %314 = vmatprep.subr.mxu0 0.0
    %315 = vmatpush1.xpose.msra.mxu0 0.0
    %316 = vmatprep.mubr.f32.mxu0 0.0
    %317 = vmatmul.mubr.f32.gmra.mrb[0].mxu0 %v245
    %v318 = vpop.f32.mrb[0].mxu0
    %v319 = vadd.f32 %v250, %v318
    %v320 = vpop.f32.mrb[0].mxu0
    %321 = vdwg.mxu0
    %v322 = vxor.u32 %v319, 2147483648
    %v323 = vmul.f32 %v322, 1.442695
    %v324 = vpow.pop %v323
    %v325 = vadd.f32 %v324, 1.0
    %v326 = vrcp.pop %v325
    %v327 = vmul.f32 1.0, %v326
    %vm328 = vcmask 64512
    %329 = vst.msk [vmem:[#allocation8] sm:$0xff] %vm328, %v327
    // Predicated region
    $region42: #{tpu_custom_call.1} parent=1 // pred_check
      _
    $region43: #{tpu_custom_call.1} parent=1 // pred_check_branch
      %331 = sbr.rel (0) target = $region45
    $region44: #{tpu_custom_call.1} parent=1 // pred_region
      %s333 = ssub.s32 128, 128
      %334 = vsyncadd [#allocation4], %s333
      %s336 = sshll.u32 [#allocation8], 4
      %s337 = int_to_ptr.vmem [resolvable:$true] %s336
      %339 = dma.vmem_to_hbm [thread:$0]  %s337, 128, %s7, [#allocation4]
    $region45: #{tpu_custom_call.1} parent=1 // pred_fallthru
      _
    // Predicated region
    $region46: #{tpu_custom_call.1} parent=1 // pred_check
      _
    $region47: #{tpu_custom_call.1} parent=1 // pred_check_branch
      %341 = sbr.rel (0) target = $region49
    $region48: #{tpu_custom_call.1} parent=1 // pred_region
      %342 = dma.done [#allocation4], 128
    $region49: #{tpu_custom_call.1} parent=1 // pred_fallthru
      _
    %343 = vsyncpa [#allocation3], 1
    %344 = vsyncpa [#allocation6], 1
    %345 = vsyncpa [#allocation4], 1

</llo_original>
